<compile_context>
chip_gen: v7x
topology: tpu7x:2x2x1
jax: 0.10.0
libtpu: 0.0.40
codegen_flags: <defaults>
</compile_context>

<pallas_src>
import jax
import jax.numpy as jnp
from jax.experimental import pallas as pl
from jax.experimental.pallas import tpu as pltpu

IN_RAW = 26
CHANNELS = 3
HID = 64

IN_F = IN_RAW * CHANNELS      # 78  (input * channel_num)
D1 = HID * 2                  # 128
D2 = HID * 4                  # 256
D3 = HID * 2                  # 128
OUT_F = 2

MAX_TB = 2048                 # upper bound on the batch tile


def _round_up(n, m):
    return ((n + m - 1) // m) * m


def _choose_tiling(B):
    """Pick (batch tile, padded batch).

    Small batches: a single waste-free tile.  Large batches: tiles of up to
    2048 rows (amortizes per-grid-step overhead) while keeping >=2 grid steps
    so v7x can shard batch tiles across its two TensorCores.  VMEM is nowhere
    near binding at this size on any generation (<8 MiB working set).
    """
    B8 = _round_up(B, 8)
    if B8 <= 1024:
        return B8, B8
    tb = min(MAX_TB, _round_up((B8 + 1) // 2, 256))
    return tb, _round_up(B8, tb)


def mtnn_kernel(alpha_ref,                 # SMEM (3,) f32 PReLU slopes (scalar prefetch)
                x_ref,                     # (TB, IN_F)  f32
                w1_ref, b1_ref,            # (IN_F, D1)  bf16, (1, D1) f32  [BN folded]
                w2_ref, b2_ref,            # (D1, D2)    bf16, (1, D2) f32  [BN folded]
                w3_ref, b3_ref,            # (D2, D3)    bf16, (1, D3) f32  [BN folded]
                w4_ref, b4_ref,            # (D3, OUT_F) bf16, (1, OUT_F) f32
                o_ref):                    # (TB, OUT_F) f32
    # No padding scratch: K=78 contraction is handled (masked) by Mosaic.
    x = x_ref[...].astype(jnp.bfloat16)

    def prelu(h, a):
        # f32 PReLU: correct + fast on every generation (v5e has no bf16 VPU).
        return jnp.where(h > 0, h, a * h)

    h = jnp.dot(x, w1_ref[...], preferred_element_type=jnp.float32) + b1_ref[...]
    h = prelu(h, alpha_ref[0])

    h = jnp.dot(h.astype(jnp.bfloat16), w2_ref[...],
                preferred_element_type=jnp.float32) + b2_ref[...]
    h = prelu(h, alpha_ref[1])

    h = jnp.dot(h.astype(jnp.bfloat16), w3_ref[...],
                preferred_element_type=jnp.float32) + b3_ref[...]
    h = prelu(h, alpha_ref[2])

    h = jnp.dot(h.astype(jnp.bfloat16), w4_ref[...],
                preferred_element_type=jnp.float32) + b4_ref[...]
    o_ref[...] = h.astype(o_ref.dtype)


def multitask_nn_forward(x, params):
    """x: (B, 78) float32 -> (B, 2) float32."""
    B = x.shape[0]
    alphas, w1, b1, w2, b2, w3, b3, w4, b4 = params

    TB, B_pad = _choose_tiling(B)
    x_in = x if B_pad == B else jnp.pad(x, ((0, B_pad - B), (0, 0)))

    def const(r, c):
        return pl.BlockSpec((r, c), lambda i, a: (0, 0))

    mm_dims = IN_F * D1 + D1 * D2 + D2 * D3 + D3 * OUT_F
    flops = 2 * B_pad * mm_dims
    bytes_accessed = (4 * B_pad * IN_F + 4 * B_pad * OUT_F
                      + 2 * mm_dims + 4 * (D1 + D2 + D3 + OUT_F))

    out = pl.pallas_call(
        mtnn_kernel,
        out_shape=jax.ShapeDtypeStruct((B_pad, OUT_F), jnp.float32),
        grid_spec=pltpu.PrefetchScalarGridSpec(
            num_scalar_prefetch=1,
            grid=(B_pad // TB,),
            in_specs=[
                pl.BlockSpec((TB, IN_F), lambda i, a: (i, 0)),
                const(IN_F, D1),  const(1, D1),
                const(D1, D2),    const(1, D2),
                const(D2, D3),    const(1, D3),
                const(D3, OUT_F), const(1, OUT_F),
            ],
            out_specs=pl.BlockSpec((TB, OUT_F), lambda i, a: (i, 0)),
        ),
        compiler_params=pltpu.CompilerParams(
            dimension_semantics=("parallel",),
            vmem_limit_bytes=32 * 1024 * 1024),
        cost_estimate=pl.CostEstimate(
            flops=flops, transcendentals=0, bytes_accessed=bytes_accessed),
    )(alphas, x_in, w1, b1, w2, b2, w3, b3, w4, b4)

    return out[:B] if B_pad != B else out


# ------------------------- parameter construction ---------------------------

def _linear_init(key, fan_in, fan_out):
    """PyTorch-style default Linear init (uniform +/- 1/sqrt(fan_in))."""
    kw, kb = jax.random.split(key)
    bound = 1.0 / jnp.sqrt(fan_in)
    w = jax.random.uniform(kw, (fan_in, fan_out), jnp.float32, -bound, bound)
    b = jax.random.uniform(kb, (fan_out,), jnp.float32, -bound, bound)
    return w, b


def _fold_bn(w, b, gamma, beta, mean, var, eps=1e-5):
    """Fold eval-mode BatchNorm1d into the preceding Linear."""
    s = gamma / jnp.sqrt(var + eps)
    return w * s[None, :], b * s + (beta - mean * s)


def make_params(key):
    k1, k2, k3, k4 = jax.random.split(key, 4)

    w1, b1 = _linear_init(k1, IN_F, D1)
    w2, b2 = _linear_init(k2, D1, D2)
    w3, b3 = _linear_init(k3, D2, D3)
    w4, b4 = _linear_init(k4, D3, OUT_F)

    # BatchNorm1d defaults: gamma=1, beta=0, running_mean=0, running_var=1
    def bn_defaults(n):
        return (jnp.ones((n,), jnp.float32), jnp.zeros((n,), jnp.float32),
                jnp.zeros((n,), jnp.float32), jnp.ones((n,), jnp.float32))

    # TODO(synk): training-mode BatchNorm1d (batch statistics) is not implemented;
    # eval-mode running stats are folded into the preceding Linear.
    w1, b1 = _fold_bn(w1, b1, *bn_defaults(D1))
    w2, b2 = _fold_bn(w2, b2, *bn_defaults(D2))
    w3, b3 = _fold_bn(w3, b3, *bn_defaults(D3))

    # PReLU default slope 0.25 (single parameter per activation layer)
    alphas = jnp.array([0.25, 0.25, 0.25], jnp.float32)

    # Kernel-side parameters: bf16 weights (single-pass MXU), f32 biases.
    kparams = (alphas,
               w1.astype(jnp.bfloat16), b1.reshape(1, D1),
               w2.astype(jnp.bfloat16), b2.reshape(1, D2),
               w3.astype(jnp.bfloat16), b3.reshape(1, D3),
               w4.astype(jnp.bfloat16), b4.reshape(1, OUT_F))
    raw = (w1, b1, w2, b2, w3, b3, w4, b4, alphas)
    return kparams, raw


def reference_forward(x, raw):
    """Plain-JAX reference mirroring the kernel numerics (bf16 matmuls, f32 accum)."""
    w1, b1, w2, b2, w3, b3, w4, b4, alphas = raw

    def mm(a, w):
        return jnp.dot(a.astype(jnp.bfloat16), w.astype(jnp.bfloat16),
                       preferred_element_type=jnp.float32)

    prelu = lambda h, a: jnp.where(h > 0, h, a * h)
    h = prelu(mm(x, w1) + b1, alphas[0])
    h = prelu(mm(h, w2) + b2, alphas[1])
    h = prelu(mm(h, w3) + b3, alphas[2])
    return mm(h, w4) + b4


if __name__ == "__main__":
    key = jax.random.PRNGKey(0)
    kx, kp = jax.random.split(key)

    B = 12                      # exercises batch padding (12 -> 16) + tail slice
    x = jax.random.normal(kx, (B, IN_F), jnp.float32)

    params, raw = make_params(kp)

    out = multitask_nn_forward(x, params)
    out = jax.block_until_ready(out)

    ref = reference_forward(x, raw)
    assert out.shape == (B, OUT_F)
    assert jnp.allclose(out, ref, atol=1e-2, rtol=1e-2), (out, ref)

    print("KERNEL_OK")
</pallas_src>

<mosaic_0001>
module attributes {stable_mosaic.version = 11 : i64} {
  func.func @mtnn_kernel(%arg0: i32, %arg1: memref<3xf32, #tpu.memory_space<smem>>, %arg2: memref<16x78xf32, #tpu.memory_space<vmem>>, %arg3: memref<78x128xbf16, #tpu.memory_space<vmem>>, %arg4: memref<1x128xf32, #tpu.memory_space<vmem>>, %arg5: memref<128x256xbf16, #tpu.memory_space<vmem>>, %arg6: memref<1x256xf32, #tpu.memory_space<vmem>>, %arg7: memref<256x128xbf16, #tpu.memory_space<vmem>>, %arg8: memref<1x128xf32, #tpu.memory_space<vmem>>, %arg9: memref<128x2xbf16, #tpu.memory_space<vmem>>, %arg10: memref<1x2xf32, #tpu.memory_space<vmem>>, %arg11: memref<16x2xf32, #tpu.memory_space<vmem>>) attributes {dimension_semantics = [#tpu.dimension_semantics<parallel>], iteration_bounds = array<i64: 1>, scalar_prefetch = 1 : i64, scratch_operands = 0 : i64, tpu.core_type = #tpu.core_type<tc>, window_params = [{transform_indices = @transform_0, window_bounds = array<i64: 16, 78>}, {pipeline_mode = #tpu.pipeline_mode<synchronous>, transform_indices = @transform_1, window_bounds = array<i64: 78, 128>}, {pipeline_mode = #tpu.pipeline_mode<synchronous>, transform_indices = @transform_2, window_bounds = array<i64: 1, 128>}, {pipeline_mode = #tpu.pipeline_mode<synchronous>, transform_indices = @transform_3, window_bounds = array<i64: 128, 256>}, {pipeline_mode = #tpu.pipeline_mode<synchronous>, transform_indices = @transform_4, window_bounds = array<i64: 1, 256>}, {pipeline_mode = #tpu.pipeline_mode<synchronous>, transform_indices = @transform_5, window_bounds = array<i64: 256, 128>}, {pipeline_mode = #tpu.pipeline_mode<synchronous>, transform_indices = @transform_6, window_bounds = array<i64: 1, 128>}, {pipeline_mode = #tpu.pipeline_mode<synchronous>, transform_indices = @transform_7, window_bounds = array<i64: 128, 2>}, {pipeline_mode = #tpu.pipeline_mode<synchronous>, transform_indices = @transform_8, window_bounds = array<i64: 1, 2>}, {transform_indices = @transform_9, window_bounds = array<i64: 16, 2>}]} {
    %c0 = arith.constant 0 : index
    %c0_0 = arith.constant 0 : index
    %0 = vector.load %arg2[%c0, %c0_0] : memref<16x78xf32, #tpu.memory_space<vmem>>, vector<16x78xf32>
    %1 = arith.truncf %0 : vector<16x78xf32> to vector<16x78xbf16>
    %c0_1 = arith.constant 0 : index
    %c0_2 = arith.constant 0 : index
    %2 = vector.load %arg3[%c0_1, %c0_2] : memref<78x128xbf16, #tpu.memory_space<vmem>>, vector<78x128xbf16>
    %cst = arith.constant dense<0.000000e+00> : vector<16x128xf32>
    %3 = tpu.matmul %1, %2, %cst {dimension_numbers = #tpu.dot_dimension_numbers<[1], [0], [0], [1], [0, 0, 1, 1], [], []>} : vector<16x78xbf16>, vector<78x128xbf16>, vector<16x128xf32> -> vector<16x128xf32>
    %c0_3 = arith.constant 0 : index
    %c0_4 = arith.constant 0 : index
    %4 = vector.load %arg4[%c0_3, %c0_4] : memref<1x128xf32, #tpu.memory_space<vmem>>, vector<1x128xf32>
    %5 = vector.broadcast %4 : vector<1x128xf32> to vector<16x128xf32>
    %6 = arith.addf %3, %5 : vector<16x128xf32>
    %c0_5 = arith.constant 0 : index
    %7 = memref.load %arg1[%c0_5] : memref<3xf32, #tpu.memory_space<smem>>
    %cst_6 = arith.constant 0.000000e+00 : f32
    %8 = vector.broadcast %cst_6 : f32 to vector<16x128xf32>
    %9 = arith.cmpf ogt, %6, %8 : vector<16x128xf32>
    %10 = vector.broadcast %7 : f32 to vector<16x128xf32>
    %11 = arith.mulf %10, %6 : vector<16x128xf32>
    %12 = arith.select %9, %6, %11 : vector<16x128xi1>, vector<16x128xf32>
    %13 = arith.truncf %12 : vector<16x128xf32> to vector<16x128xbf16>
    %c0_7 = arith.constant 0 : index
    %c0_8 = arith.constant 0 : index
    %14 = vector.load %arg5[%c0_7, %c0_8] : memref<128x256xbf16, #tpu.memory_space<vmem>>, vector<128x256xbf16>
    %cst_9 = arith.constant dense<0.000000e+00> : vector<16x256xf32>
    %15 = tpu.matmul %13, %14, %cst_9 {dimension_numbers = #tpu.dot_dimension_numbers<[1], [0], [0], [1], [0, 0, 1, 1], [], []>} : vector<16x128xbf16>, vector<128x256xbf16>, vector<16x256xf32> -> vector<16x256xf32>
    %c0_10 = arith.constant 0 : index
    %c0_11 = arith.constant 0 : index
    %16 = vector.load %arg6[%c0_10, %c0_11] : memref<1x256xf32, #tpu.memory_space<vmem>>, vector<1x256xf32>
    %17 = vector.broadcast %16 : vector<1x256xf32> to vector<16x256xf32>
    %18 = arith.addf %15, %17 : vector<16x256xf32>
    %c1 = arith.constant 1 : index
    %19 = memref.load %arg1[%c1] : memref<3xf32, #tpu.memory_space<smem>>
    %cst_12 = arith.constant 0.000000e+00 : f32
    %20 = vector.broadcast %cst_12 : f32 to vector<16x256xf32>
    %21 = arith.cmpf ogt, %18, %20 : vector<16x256xf32>
    %22 = vector.broadcast %19 : f32 to vector<16x256xf32>
    %23 = arith.mulf %22, %18 : vector<16x256xf32>
    %24 = arith.select %21, %18, %23 : vector<16x256xi1>, vector<16x256xf32>
    %25 = arith.truncf %24 : vector<16x256xf32> to vector<16x256xbf16>
    %c0_13 = arith.constant 0 : index
    %c0_14 = arith.constant 0 : index
    %26 = vector.load %arg7[%c0_13, %c0_14] : memref<256x128xbf16, #tpu.memory_space<vmem>>, vector<256x128xbf16>
    %cst_15 = arith.constant dense<0.000000e+00> : vector<16x128xf32>
    %27 = tpu.matmul %25, %26, %cst_15 {dimension_numbers = #tpu.dot_dimension_numbers<[1], [0], [0], [1], [0, 0, 1, 1], [], []>} : vector<16x256xbf16>, vector<256x128xbf16>, vector<16x128xf32> -> vector<16x128xf32>
    %c0_16 = arith.constant 0 : index
    %c0_17 = arith.constant 0 : index
    %28 = vector.load %arg8[%c0_16, %c0_17] : memref<1x128xf32, #tpu.memory_space<vmem>>, vector<1x128xf32>
    %29 = vector.broadcast %28 : vector<1x128xf32> to vector<16x128xf32>
    %30 = arith.addf %27, %29 : vector<16x128xf32>
    %c2 = arith.constant 2 : index
    %31 = memref.load %arg1[%c2] : memref<3xf32, #tpu.memory_space<smem>>
    %cst_18 = arith.constant 0.000000e+00 : f32
    %32 = vector.broadcast %cst_18 : f32 to vector<16x128xf32>
    %33 = arith.cmpf ogt, %30, %32 : vector<16x128xf32>
    %34 = vector.broadcast %31 : f32 to vector<16x128xf32>
    %35 = arith.mulf %34, %30 : vector<16x128xf32>
    %36 = arith.select %33, %30, %35 : vector<16x128xi1>, vector<16x128xf32>
    %37 = arith.truncf %36 : vector<16x128xf32> to vector<16x128xbf16>
    %c0_19 = arith.constant 0 : index
    %c0_20 = arith.constant 0 : index
    %38 = vector.load %arg9[%c0_19, %c0_20] : memref<128x2xbf16, #tpu.memory_space<vmem>>, vector<128x2xbf16>
    %cst_21 = arith.constant dense<0.000000e+00> : vector<16x2xf32>
    %39 = tpu.matmul %37, %38, %cst_21 {dimension_numbers = #tpu.dot_dimension_numbers<[1], [0], [0], [1], [0, 0, 1, 1], [], []>} : vector<16x128xbf16>, vector<128x2xbf16>, vector<16x2xf32> -> vector<16x2xf32>
    %c0_22 = arith.constant 0 : index
    %c0_23 = arith.constant 0 : index
    %40 = vector.load %arg10[%c0_22, %c0_23] : memref<1x2xf32, #tpu.memory_space<vmem>>, vector<1x2xf32>
    %41 = vector.broadcast %40 : vector<1x2xf32> to vector<16x2xf32>
    %42 = arith.addf %39, %41 : vector<16x2xf32>
    %c0_24 = arith.constant 0 : index
    %c0_25 = arith.constant 0 : index
    %43 = vector.load %arg11[%c0_24, %c0_25] : memref<16x2xf32, #tpu.memory_space<vmem>>, vector<16x2xf32>
    tpu.vector_store %arg11[%c0_24, %c0_25], %42 {strides = array<i32>} : memref<16x2xf32, #tpu.memory_space<vmem>>, vector<16x2xf32>,
    return
  }
  func.func @transform_0(%arg0: i32, %arg1: memref<3xf32, #tpu.memory_space<smem>>) -> (i32, i32) {
    %c0_i32 = arith.constant 0 : i32
    %c0_i32_0 = arith.constant 0 : i32
    return %arg0, %c0_i32 : i32, i32
  }
  func.func @transform_1(%arg0: i32, %arg1: memref<3xf32, #tpu.memory_space<smem>>) -> (i32, i32) {
    %c0_i32 = arith.constant 0 : i32
    %c0_i32_0 = arith.constant 0 : i32
    %c0_i32_1 = arith.constant 0 : i32
    return %c0_i32, %c0_i32_0 : i32, i32
  }
  func.func @transform_2(%arg0: i32, %arg1: memref<3xf32, #tpu.memory_space<smem>>) -> (i32, i32) {
    %c0_i32 = arith.constant 0 : i32
    %c0_i32_0 = arith.constant 0 : i32
    %c0_i32_1 = arith.constant 0 : i32
    return %c0_i32, %c0_i32_0 : i32, i32
  }
  func.func @transform_3(%arg0: i32, %arg1: memref<3xf32, #tpu.memory_space<smem>>) -> (i32, i32) {
    %c0_i32 = arith.constant 0 : i32
    %c0_i32_0 = arith.constant 0 : i32
    %c0_i32_1 = arith.constant 0 : i32
    return %c0_i32, %c0_i32_0 : i32, i32
  }
  func.func @transform_4(%arg0: i32, %arg1: memref<3xf32, #tpu.memory_space<smem>>) -> (i32, i32) {
    %c0_i32 = arith.constant 0 : i32
    %c0_i32_0 = arith.constant 0 : i32
    %c0_i32_1 = arith.constant 0 : i32
    return %c0_i32, %c0_i32_0 : i32, i32
  }
  func.func @transform_5(%arg0: i32, %arg1: memref<3xf32, #tpu.memory_space<smem>>) -> (i32, i32) {
    %c0_i32 = arith.constant 0 : i32
    %c0_i32_0 = arith.constant 0 : i32
    %c0_i32_1 = arith.constant 0 : i32
    return %c0_i32, %c0_i32_0 : i32, i32
  }
  func.func @transform_6(%arg0: i32, %arg1: memref<3xf32, #tpu.memory_space<smem>>) -> (i32, i32) {
    %c0_i32 = arith.constant 0 : i32
    %c0_i32_0 = arith.constant 0 : i32
    %c0_i32_1 = arith.constant 0 : i32
    return %c0_i32, %c0_i32_0 : i32, i32
  }
  func.func @transform_7(%arg0: i32, %arg1: memref<3xf32, #tpu.memory_space<smem>>) -> (i32, i32) {
    %c0_i32 = arith.constant 0 : i32
    %c0_i32_0 = arith.constant 0 : i32
    %c0_i32_1 = arith.constant 0 : i32
    return %c0_i32, %c0_i32_0 : i32, i32
  }
  func.func @transform_8(%arg0: i32, %arg1: memref<3xf32, #tpu.memory_space<smem>>) -> (i32, i32) {
    %c0_i32 = arith.constant 0 : i32
    %c0_i32_0 = arith.constant 0 : i32
    %c0_i32_1 = arith.constant 0 : i32
    return %c0_i32, %c0_i32_0 : i32, i32
  }
  func.func @transform_9(%arg0: i32, %arg1: memref<3xf32, #tpu.memory_space<smem>>) -> (i32, i32) {
    %c0_i32 = arith.constant 0 : i32
    %c0_i32_0 = arith.constant 0 : i32
    return %arg0, %c0_i32 : i32, i32
  }
}

</mosaic_0001>

<llo_original>
// kernel: tpu_custom_call.1
$region0: #{tpu_custom_call.1}
  #allocation0 [shape = 'u32[]', space=smem, size = 0x4, offset = 0x4, fixed_abs, tag = 'smem constant byte address 0x4 - core index']
  #allocation1 [shape = 'u32[144,128]{1,0:T(1,128)}', space=vmem, size = 0x12000, scoped, tag = 'internal scratch']
  #allocation2 [shape = 's32[1]{0}', space=sflag, size = 0x4, scoped, tag = 'scoped memory for tpu_custom_call.1']
  #allocation3 [shape = 'u8[512]{0}', space=smem, size = 0x200, scoped, tag = 'prefetched SMEM operand 0']
  %s0 = inlined_call_operand.vmem [shape: f32[3], index: 0, kind: input, shape index: {}]
  %s1 = inlined_call_operand.vmem [shape: f32[16,78], index: 1, kind: input, shape index: {}]
  %s2 = inlined_call_operand.vmem [shape: bf16[78,128], index: 2, kind: input, shape index: {}]
  %s3 = inlined_call_operand.vmem [shape: f32[1,128], index: 3, kind: input, shape index: {}]
  %s4 = inlined_call_operand.hbm [shape: bf16[128,256], index: 4, kind: input, shape index: {}]
  %s5 = inlined_call_operand.vmem [shape: f32[1,256], index: 5, kind: input, shape index: {}]
  %s6 = inlined_call_operand.hbm [shape: bf16[256,128], index: 6, kind: input, shape index: {}]
  %s7 = inlined_call_operand.vmem [shape: f32[1,128], index: 7, kind: input, shape index: {}]
  %s8 = inlined_call_operand.vmem [shape: bf16[128,2], index: 8, kind: input, shape index: {}]
  %s9 = inlined_call_operand.vmem [shape: f32[1,2], index: 9, kind: input, shape index: {}]
  %s10 = inlined_call_operand.vmem [shape: f32[16,2], index: 10, kind: output, shape index: {}]
  %s11 = sld [smem:[#allocation0]]
  $region54: #{tpu_custom_call.1} parent=0
    _
  %s13 = ssub.s32 1, %s11
  %s14 = scalar_select 0, %s13, %s11
  %s15 = sshll.u32 %s0, 4
  %s16 = int_to_ptr.vmem [resolvable:$true] %s15
  %18 = dma.vmem_to_smem %s16, 16, [#allocation3], [#allocation2]
  %19 = dma.done [#allocation2], 16
  %20 = sfence
  $region1: #{tpu_custom_call.1} parent=0
    #allocation4 [shape = 'u8[65536]{0}', space=vmem, size = 0x10000, scoped, tag = 'input window, operand 4, single buffered']
    #allocation5 [shape = 's32[1]{0}', space=sflag, size = 0x4, scoped, tag = 'scoped memory for tpu_custom_call.1']
    #allocation6 [shape = 'u8[65536]{0}', space=vmem, size = 0x10000, scoped, tag = 'input window, operand 6, single buffered']
    #allocation7 [shape = 's32[1]{0}', space=sflag, size = 0x4, scoped, tag = 'scoped memory for tpu_custom_call.1']
    %21 = vsyncpa [#allocation5], 0
    %22 = vsyncpa [#allocation7], 0
    // Predicated region
    $region2: #{tpu_custom_call.1} parent=1 // pred_check
      _
    $region3: #{tpu_custom_call.1} parent=1 // pred_check_branch
      %24 = sbr.rel (0) target = $region5
    $region4: #{tpu_custom_call.1} parent=1 // pred_region
      _
    $region5: #{tpu_custom_call.1} parent=1 // pred_fallthru
      _
    // Predicated region
    $region6: #{tpu_custom_call.1} parent=1 // pred_check
      _
    $region7: #{tpu_custom_call.1} parent=1 // pred_check_branch
      %26 = sbr.rel (0) target = $region9
    $region8: #{tpu_custom_call.1} parent=1 // pred_region
      _
    $region9: #{tpu_custom_call.1} parent=1 // pred_fallthru
      _
    // Predicated region
    $region10: #{tpu_custom_call.1} parent=1 // pred_check
      _
    $region11: #{tpu_custom_call.1} parent=1 // pred_check_branch
      %28 = sbr.rel (0) target = $region13
    $region12: #{tpu_custom_call.1} parent=1 // pred_region
      _
    $region13: #{tpu_custom_call.1} parent=1 // pred_fallthru
      _
    // Predicated region
    $region14: #{tpu_custom_call.1} parent=1 // pred_check
      _
    $region15: #{tpu_custom_call.1} parent=1 // pred_check_branch
      %30 = sbr.rel (0) target = $region17
    $region16: #{tpu_custom_call.1} parent=1 // pred_region
      %s32 = ssub.s32 2048, 2048
      %33 = vsyncadd [#allocation5], %s32
      %s34 = sshll.u32 [#allocation4], 4
      %s35 = int_to_ptr.vmem [resolvable:$true] %s34
      %40 = dma.hbm_to_vmem [thread:$0]  %s4, 2048, %s35, [#allocation5], 128, 128, 8
    $region17: #{tpu_custom_call.1} parent=1 // pred_fallthru
      _
    // Predicated region
    $region18: #{tpu_custom_call.1} parent=1 // pred_check
      _
    $region19: #{tpu_custom_call.1} parent=1 // pred_check_branch
      %42 = sbr.rel (0) target = $region21
    $region20: #{tpu_custom_call.1} parent=1 // pred_region
      _
    $region21: #{tpu_custom_call.1} parent=1 // pred_fallthru
      _
    // Predicated region
    $region22: #{tpu_custom_call.1} parent=1 // pred_check
      _
    $region23: #{tpu_custom_call.1} parent=1 // pred_check_branch
      %44 = sbr.rel (0) target = $region25
    $region24: #{tpu_custom_call.1} parent=1 // pred_region
      %s46 = ssub.s32 2048, 2048
      %47 = vsyncadd [#allocation7], %s46
      %s48 = sshll.u32 [#allocation6], 4
      %s49 = int_to_ptr.vmem [resolvable:$true] %s48
      %54 = dma.hbm_to_vmem [thread:$0]  %s6, 2048, %s49, [#allocation7], 64, 64, 4
    $region25: #{tpu_custom_call.1} parent=1 // pred_fallthru
      _
    // Predicated region
    $region26: #{tpu_custom_call.1} parent=1 // pred_check
      _
    $region27: #{tpu_custom_call.1} parent=1 // pred_check_branch
      %56 = sbr.rel (0) target = $region29
    $region28: #{tpu_custom_call.1} parent=1 // pred_region
      _
    $region29: #{tpu_custom_call.1} parent=1 // pred_fallthru
      _
    // Predicated region
    $region30: #{tpu_custom_call.1} parent=1 // pred_check
      _
    $region31: #{tpu_custom_call.1} parent=1 // pred_check_branch
      %58 = sbr.rel (0) target = $region33
    $region32: #{tpu_custom_call.1} parent=1 // pred_region
      _
    $region33: #{tpu_custom_call.1} parent=1 // pred_fallthru
      _
    // Predicated region
    $region34: #{tpu_custom_call.1} parent=1 // pred_check
      _
    $region35: #{tpu_custom_call.1} parent=1 // pred_check_branch
      %60 = sbr.rel (0) target = $region37
    $region36: #{tpu_custom_call.1} parent=1 // pred_region
      _
    $region37: #{tpu_custom_call.1} parent=1 // pred_fallthru
      _
    // Predicated region
    $region38: #{tpu_custom_call.1} parent=1 // pred_check
      _
    $region39: #{tpu_custom_call.1} parent=1 // pred_check_branch
      %62 = sbr.rel (0) target = $region41
    $region40: #{tpu_custom_call.1} parent=1 // pred_region
      %63 = dma.done [#allocation5], 2048
    $region41: #{tpu_custom_call.1} parent=1 // pred_fallthru
      _
    // Predicated region
    $region42: #{tpu_custom_call.1} parent=1 // pred_check
      _
    $region43: #{tpu_custom_call.1} parent=1 // pred_check_branch
      %65 = sbr.rel (0) target = $region45
    $region44: #{tpu_custom_call.1} parent=1 // pred_region
      %66 = dma.done [#allocation7], 2048
    $region45: #{tpu_custom_call.1} parent=1 // pred_fallthru
      _
    %v68 = vld [vmem:[%s1] sm:$0xff]
    %v69 = vld [vmem:[%s1 + $0x8] sm:$0xff]
    %v70 = vpack.c.bf16 %v69, %v68
    %v71 = vld [vmem:[%s2] sm:$0xf]
    %v72 = vld [vmem:[%s2 + $0x4] sm:$0xf]
    %v73 = vld [vmem:[%s2 + $0x8] sm:$0xf]
    %v74 = vld [vmem:[%s2 + $0xc] sm:$0xf]
    %v75 = vld [vmem:[%s2 + $0x10] sm:$0xf]
    %v76 = vld [vmem:[%s2 + $0x14] sm:$0xf]
    %v77 = vld [vmem:[%s2 + $0x18] sm:$0xf]
    %v78 = vld [vmem:[%s2 + $0x1c] sm:$0xf]
    %v79 = vld [vmem:[%s2 + $0x20] sm:$0xf]
    %v80 = vld [vmem:[%s2 + $0x24] sm:$0x7]
    %v81 = vld [vmem:[%s3] sm:$0x1]
    %v83 = vlaneseq
    %v84 = vshrl.u32 %v83, 7
    %v85 = vsub.s32 0, %v84
    %v86 = vrot.slane %v81, %v85
    %v98 = vunpack.c.l.b16 %v71
    %v99 = vunpack.c.l.b16 %v72
    %v100 = vunpack.c.l.b16 %v73
    %v101 = vunpack.c.l.b16 %v74
    %v102 = vunpack.c.l.b16 %v75
    %v103 = vunpack.c.l.b16 %v76
    %v104 = vunpack.c.l.b16 %v77
    %v105 = vunpack.c.l.b16 %v78
    %v106 = vunpack.c.l.b16 %v79
    %v107 = vunpack.c.l.b16 %v80
    %v108 = vpack.c.b16 %v99, %v98
    %v109 = vpack.c.b16 %v101, %v100
    %v110 = vpack.c.b16 %v103, %v102
    %v111 = vpack.c.b16 %v105, %v104
    %v112 = vpack.c.b16 %v107, %v106
    %vm117 = vcmask 637952
    %v119 = vsel %vm117, %v70, 0
    %vm121 = vcmask 1046528
    %v123 = vsel %vm121, %v112, 0
    %125 = vmatprep.subr.bf16.mxu0 0
    %126 = vmatpush1.bf16.msra.mxu0 %v108
    %127 = vmatprep.subr.bf16.mxu0 0
    %128 = vmatpush1.bf16.msra.mxu0 %v109
    %129 = vmatprep.subr.bf16.mxu0 0
    %130 = vmatpush1.bf16.msra.mxu0 %v110
    %131 = vmatprep.subr.bf16.mxu0 0
    %132 = vmatpush1.bf16.msra.mxu0 %v111
    %133 = vmatprep.subr.bf16.mxu0 0
    %134 = vmatpush1.bf16.msra.mxu0 %v123
    %135 = vmatprep.subr.bf16.mxu0 0
    %136 = vmatpush1.bf16.msra.mxu0 0
    %137 = vmatprep.subr.bf16.mxu0 0
    %138 = vmatpush1.bf16.msra.mxu0 0
    %139 = vmatprep.subr.bf16.mxu0 0
    %140 = vmatpush1.bf16.msra.mxu0 0
    %141 = vmatprep.subr.bf16.mxu0 0
    %142 = vmatpush1.bf16.msra.mxu0 0
    %143 = vmatprep.subr.bf16.mxu0 0
    %144 = vmatpush1.bf16.msra.mxu0 0
    %145 = vmatprep.subr.bf16.mxu0 0
    %146 = vmatpush1.bf16.msra.mxu0 0
    %147 = vmatprep.subr.bf16.mxu0 0
    %148 = vmatpush1.bf16.msra.mxu0 0
    %149 = vmatprep.subr.bf16.mxu0 0
    %150 = vmatpush1.bf16.msra.mxu0 0
    %151 = vmatprep.subr.bf16.mxu0 0
    %152 = vmatpush1.bf16.msra.mxu0 0
    %153 = vmatprep.subr.bf16.mxu0 0
    %154 = vmatpush1.bf16.msra.mxu0 0
    %155 = vmatprep.subr.bf16.mxu0 0
    %156 = vmatpush1.bf16.msra.mxu0 0
    %157 = vmatprep.mubr.bf16.mxu0 0
    %158 = vmatmul.mubr.bf16.gmra.mrb[0].mxu0 %v119
    %v159 = vpop.f32.mrb[0].mxu0
    %v160 = vadd.f32 %v86, %v159
    %v161 = vpop.f32.mrb[0].mxu0
    %v162 = vpop.f32.mrb[0].mxu0
    %v163 = vadd.f32 %v86, %v162
    %v164 = vpop.f32.mrb[0].mxu0
    %165 = vdwg.mxu0
    %s166 = sld [smem:[#allocation3]]
    %vm167 = vcmp.gt.f32.partialorder %v160, 0.0
    %vm168 = vcmp.gt.f32.partialorder %v163, 0.0
    %v169 = vstv %s166
    %v170 = vmul.f32 %v169, %v160
    %v171 = vmul.f32 %v169, %v163
    %v172 = vsel %vm167, %v160, %v170
    %v173 = vsel %vm168, %v163, %v171
    %v174 = vpack.c.bf16 %v173, %v172
    %v175 = vld [vmem:[#allocation4] sm:$0xff]
    %v176 = vld [vmem:[#allocation4 + $0x8] sm:$0xff]
    %v177 = vld [vmem:[#allocation4 + $0x10] sm:$0xff]
    %v178 = vld [vmem:[#allocation4 + $0x18] sm:$0xff]
    %v179 = vld [vmem:[#allocation4 + $0x20] sm:$0xff]
    %v180 = vld [vmem:[#allocation4 + $0x28] sm:$0xff]
    %v181 = vld [vmem:[#allocation4 + $0x30] sm:$0xff]
    %v182 = vld [vmem:[#allocation4 + $0x38] sm:$0xff]
    %v183 = vld [vmem:[#allocation4 + $0x40] sm:$0xff]
    %v184 = vld [vmem:[#allocation4 + $0x48] sm:$0xff]
    %v185 = vld [vmem:[#allocation4 + $0x50] sm:$0xff]
    %v186 = vld [vmem:[#allocation4 + $0x58] sm:$0xff]
    %v187 = vld [vmem:[#allocation4 + $0x60] sm:$0xff]
    %v188 = vld [vmem:[#allocation4 + $0x68] sm:$0xff]
    %v189 = vld [vmem:[#allocation4 + $0x70] sm:$0xff]
    %v190 = vld [vmem:[#allocation4 + $0x78] sm:$0xff]
    %v191 = vld [vmem:[%s5] sm:$0x3]
    %v193 = vlaneseq
    %v194 = vshrl.u32 %v193, 7
    %v195 = vsub.s32 0, %v194
    %v196 = vrot.slane %v191, %v195
    %v197 = vlaneseq
    %v198 = vshrl.u32 %v197, 7
    %v199 = vsub.s32 1, %v198
    %v200 = vrot.slane %v191, %v199
    %v219 = vunpack.c.l.b16 %v175
    %v220 = vunpack.c.h.b16 %v175
    %v221 = vunpack.c.l.b16 %v176
    %v222 = vunpack.c.h.b16 %v176
    %v223 = vunpack.c.l.b16 %v177
    %v224 = vunpack.c.h.b16 %v177
    %v225 = vunpack.c.l.b16 %v178
    %v226 = vunpack.c.h.b16 %v178
    %v227 = vunpack.c.l.b16 %v179
    %v228 = vunpack.c.h.b16 %v179
    %v229 = vunpack.c.l.b16 %v180
    %v230 = vunpack.c.h.b16 %v180
    %v231 = vunpack.c.l.b16 %v181
    %v232 = vunpack.c.h.b16 %v181
    %v233 = vunpack.c.l.b16 %v182
    %v234 = vunpack.c.h.b16 %v182
    %v235 = vunpack.c.l.b16 %v183
    %v236 = vunpack.c.h.b16 %v183
    %v237 = vunpack.c.l.b16 %v184
    %v238 = vunpack.c.h.b16 %v184
    %v239 = vunpack.c.l.b16 %v185
    %v240 = vunpack.c.h.b16 %v185
    %v241 = vunpack.c.l.b16 %v186
    %v242 = vunpack.c.h.b16 %v186
    %v243 = vunpack.c.l.b16 %v187
    %v244 = vunpack.c.h.b16 %v187
    %v245 = vunpack.c.l.b16 %v188
    %v246 = vunpack.c.h.b16 %v188
    %v247 = vunpack.c.l.b16 %v189
    %v248 = vunpack.c.h.b16 %v189
    %v249 = vunpack.c.l.b16 %v190
    %v250 = vunpack.c.h.b16 %v190
    %v251 = vpack.c.b16 %v221, %v219
    %v252 = vpack.c.b16 %v222, %v220
    %v253 = vpack.c.b16 %v225, %v223
    %v254 = vpack.c.b16 %v226, %v224
    %v255 = vpack.c.b16 %v229, %v227
    %v256 = vpack.c.b16 %v230, %v228
    %v257 = vpack.c.b16 %v233, %v231
    %v258 = vpack.c.b16 %v234, %v232
    %v259 = vpack.c.b16 %v237, %v235
    %v260 = vpack.c.b16 %v238, %v236
    %v261 = vpack.c.b16 %v241, %v239
    %v262 = vpack.c.b16 %v242, %v240
    %v263 = vpack.c.b16 %v245, %v243
    %v264 = vpack.c.b16 %v246, %v244
    %v265 = vpack.c.b16 %v249, %v247
    %v266 = vpack.c.b16 %v250, %v248
    %283 = vmatprep.subr.bf16.mxu0 %v252
    %284 = vmatpush1.bf16.msra.mxu0 %v251
    %285 = vmatprep.subr.bf16.mxu0 %v254
    %286 = vmatpush1.bf16.msra.mxu0 %v253
    %287 = vmatprep.subr.bf16.mxu0 %v256
    %288 = vmatpush1.bf16.msra.mxu0 %v255
    %289 = vmatprep.subr.bf16.mxu0 %v258
    %290 = vmatpush1.bf16.msra.mxu0 %v257
    %291 = vmatprep.subr.bf16.mxu0 %v260
    %292 = vmatpush1.bf16.msra.mxu0 %v259
    %293 = vmatprep.subr.bf16.mxu0 %v262
    %294 = vmatpush1.bf16.msra.mxu0 %v261
    %295 = vmatprep.subr.bf16.mxu0 %v264
    %296 = vmatpush1.bf16.msra.mxu0 %v263
    %297 = vmatprep.subr.bf16.mxu0 %v266
    %298 = vmatpush1.bf16.msra.mxu0 %v265
    %299 = vmatprep.subr.bf16.mxu0 0
    %300 = vmatpush1.bf16.msra.mxu0 0
    %301 = vmatprep.subr.bf16.mxu0 0
    %302 = vmatpush1.bf16.msra.mxu0 0
    %303 = vmatprep.subr.bf16.mxu0 0
    %304 = vmatpush1.bf16.msra.mxu0 0
    %305 = vmatprep.subr.bf16.mxu0 0
    %306 = vmatpush1.bf16.msra.mxu0 0
    %307 = vmatprep.subr.bf16.mxu0 0
    %308 = vmatpush1.bf16.msra.mxu0 0
    %309 = vmatprep.subr.bf16.mxu0 0
    %310 = vmatpush1.bf16.msra.mxu0 0
    %311 = vmatprep.subr.bf16.mxu0 0
    %312 = vmatpush1.bf16.msra.mxu0 0
    %313 = vmatprep.subr.bf16.mxu0 0
    %314 = vmatpush1.bf16.msra.mxu0 0
    %315 = vmatprep.mubr.bf16.mxu0 0
    %316 = vmatmul.mubr.bf16.gmra.mrb[0].mxu0 %v174
    %v317 = vpop.f32.mrb[0].mxu0
    %v318 = vadd.f32 %v196, %v317
    %v319 = vpop.f32.mrb[0].mxu0
    %v320 = vadd.f32 %v200, %v319
    %v321 = vpop.f32.mrb[0].mxu0
    %v322 = vadd.f32 %v196, %v321
    %v323 = vpop.f32.mrb[0].mxu0
    %v324 = vadd.f32 %v200, %v323
    %325 = vdwg.mxu0
    %s326 = sld [smem:[#allocation3 + $0x1]]
    %vm327 = vcmp.gt.f32.partialorder %v318, 0.0
    %vm328 = vcmp.gt.f32.partialorder %v320, 0.0
    %vm329 = vcmp.gt.f32.partialorder %v322, 0.0
    %vm330 = vcmp.gt.f32.partialorder %v324, 0.0
    %v331 = vstv %s326
    %v332 = vmul.f32 %v331, %v318
    %v333 = vmul.f32 %v331, %v320
    %v334 = vmul.f32 %v331, %v322
    %v335 = vmul.f32 %v331, %v324
    %v336 = vsel %vm327, %v318, %v332
    %v337 = vsel %vm328, %v320, %v333
    %v338 = vsel %vm329, %v322, %v334
    %v339 = vsel %vm330, %v324, %v335
    %v340 = vpack.c.bf16 %v338, %v336
    %v341 = vpack.c.bf16 %v339, %v337
    %v342 = vld [vmem:[#allocation6] sm:$0xf]
    %v343 = vld [vmem:[#allocation6 + $0x4] sm:$0xf]
    %v344 = vld [vmem:[#allocation6 + $0x8] sm:$0xf]
    %v345 = vld [vmem:[#allocation6 + $0xc] sm:$0xf]
    %v346 = vld [vmem:[#allocation6 + $0x10] sm:$0xf]
    %v347 = vld [vmem:[#allocation6 + $0x14] sm:$0xf]
    %v348 = vld [vmem:[#allocation6 + $0x18] sm:$0xf]
    %v349 = vld [vmem:[#allocation6 + $0x1c] sm:$0xf]
    %v350 = vld [vmem:[#allocation6 + $0x20] sm:$0xf]
    %v351 = vld [vmem:[#allocation6 + $0x24] sm:$0xf]
    %v352 = vld [vmem:[#allocation6 + $0x28] sm:$0xf]
    %v353 = vld [vmem:[#allocation6 + $0x2c] sm:$0xf]
    %v354 = vld [vmem:[#allocation6 + $0x30] sm:$0xf]
    %v355 = vld [vmem:[#allocation6 + $0x34] sm:$0xf]
    %v356 = vld [vmem:[#allocation6 + $0x38] sm:$0xf]
    %v357 = vld [vmem:[#allocation6 + $0x3c] sm:$0xf]
    %v358 = vld [vmem:[#allocation6 + $0x40] sm:$0xf]
    %v359 = vld [vmem:[#allocation6 + $0x44] sm:$0xf]
    %v360 = vld [vmem:[#allocation6 + $0x48] sm:$0xf]
    %v361 = vld [vmem:[#allocation6 + $0x4c] sm:$0xf]
    %v362 = vld [vmem:[#allocation6 + $0x50] sm:$0xf]
    %v363 = vld [vmem:[#allocation6 + $0x54] sm:$0xf]
    %v364 = vld [vmem:[#allocation6 + $0x58] sm:$0xf]
    %v365 = vld [vmem:[#allocation6 + $0x5c] sm:$0xf]
    %v366 = vld [vmem:[#allocation6 + $0x60] sm:$0xf]
    %v367 = vld [vmem:[#allocation6 + $0x64] sm:$0xf]
    %v368 = vld [vmem:[#allocation6 + $0x68] sm:$0xf]
    %v369 = vld [vmem:[#allocation6 + $0x6c] sm:$0xf]
    %v370 = vld [vmem:[#allocation6 + $0x70] sm:$0xf]
    %v371 = vld [vmem:[#allocation6 + $0x74] sm:$0xf]
    %v372 = vld [vmem:[#allocation6 + $0x78] sm:$0xf]
    %v373 = vld [vmem:[#allocation6 + $0x7c] sm:$0xf]
    %v374 = vld [vmem:[%s7] sm:$0x1]
    %v376 = vlaneseq
    %v377 = vshrl.u32 %v376, 7
    %v378 = vsub.s32 0, %v377
    %v379 = vrot.slane %v374, %v378
    %v413 = vunpack.c.l.b16 %v342
    %v414 = vunpack.c.l.b16 %v343
    %v415 = vunpack.c.l.b16 %v344
    %v416 = vunpack.c.l.b16 %v345
    %v417 = vunpack.c.l.b16 %v346
    %v418 = vunpack.c.l.b16 %v347
    %v419 = vunpack.c.l.b16 %v348
    %v420 = vunpack.c.l.b16 %v349
    %v421 = vunpack.c.l.b16 %v350
    %v422 = vunpack.c.l.b16 %v351
    %v423 = vunpack.c.l.b16 %v352
    %v424 = vunpack.c.l.b16 %v353
    %v425 = vunpack.c.l.b16 %v354
    %v426 = vunpack.c.l.b16 %v355
    %v427 = vunpack.c.l.b16 %v356
    %v428 = vunpack.c.l.b16 %v357
    %v429 = vunpack.c.l.b16 %v358
    %v430 = vunpack.c.l.b16 %v359
    %v431 = vunpack.c.l.b16 %v360
    %v432 = vunpack.c.l.b16 %v361
    %v433 = vunpack.c.l.b16 %v362
    %v434 = vunpack.c.l.b16 %v363
    %v435 = vunpack.c.l.b16 %v364
    %v436 = vunpack.c.l.b16 %v365
    %v437 = vunpack.c.l.b16 %v366
    %v438 = vunpack.c.l.b16 %v367
    %v439 = vunpack.c.l.b16 %v368
    %v440 = vunpack.c.l.b16 %v369
    %v441 = vunpack.c.l.b16 %v370
    %v442 = vunpack.c.l.b16 %v371
    %v443 = vunpack.c.l.b16 %v372
    %v444 = vunpack.c.l.b16 %v373
    %v445 = vpack.c.b16 %v414, %v413
    %v446 = vpack.c.b16 %v416, %v415
    %v447 = vpack.c.b16 %v418, %v417
    %v448 = vpack.c.b16 %v420, %v419
    %v449 = vpack.c.b16 %v422, %v421
    %v450 = vpack.c.b16 %v424, %v423
    %v451 = vpack.c.b16 %v426, %v425
    %v452 = vpack.c.b16 %v428, %v427
    %v453 = vpack.c.b16 %v430, %v429
    %v454 = vpack.c.b16 %v432, %v431
    %v455 = vpack.c.b16 %v434, %v433
    %v456 = vpack.c.b16 %v436, %v435
    %v457 = vpack.c.b16 %v438, %v437
    %v458 = vpack.c.b16 %v440, %v439
    %v459 = vpack.c.b16 %v442, %v441
    %v460 = vpack.c.b16 %v444, %v443
    %477 = vmatprep.subr.bf16.mxu0 0
    %478 = vmatpush1.bf16.msra.mxu0 %v445
    %479 = vmatprep.subr.bf16.mxu0 0
    %480 = vmatpush1.bf16.msra.mxu0 %v446
    %481 = vmatprep.subr.bf16.mxu0 0
    %482 = vmatpush1.bf16.msra.mxu0 %v447
    %483 = vmatprep.subr.bf16.mxu0 0
    %484 = vmatpush1.bf16.msra.mxu0 %v448
    %485 = vmatprep.subr.bf16.mxu0 0
    %486 = vmatpush1.bf16.msra.mxu0 %v449
    %487 = vmatprep.subr.bf16.mxu0 0
    %488 = vmatpush1.bf16.msra.mxu0 %v450
    %489 = vmatprep.subr.bf16.mxu0 0
    %490 = vmatpush1.bf16.msra.mxu0 %v451
    %491 = vmatprep.subr.bf16.mxu0 0
    %492 = vmatpush1.bf16.msra.mxu0 %v452
    %493 = vmatprep.subr.bf16.mxu0 0
    %494 = vmatpush1.bf16.msra.mxu0 %v453
    %495 = vmatprep.subr.bf16.mxu0 0
    %496 = vmatpush1.bf16.msra.mxu0 %v454
    %497 = vmatprep.subr.bf16.mxu0 0
    %498 = vmatpush1.bf16.msra.mxu0 %v455
    %499 = vmatprep.subr.bf16.mxu0 0
    %500 = vmatpush1.bf16.msra.mxu0 %v456
    %501 = vmatprep.subr.bf16.mxu0 0
    %502 = vmatpush1.bf16.msra.mxu0 %v457
    %503 = vmatprep.subr.bf16.mxu0 0
    %504 = vmatpush1.bf16.msra.mxu0 %v458
    %505 = vmatprep.subr.bf16.mxu0 0
    %506 = vmatpush1.bf16.msra.mxu0 %v459
    %507 = vmatprep.subr.bf16.mxu0 0
    %508 = vmatpush1.bf16.msra.mxu0 %v460
    %509 = vmatprep.mubr.bf16.mxu0 %v341
    %510 = vmatmul.mubr.bf16.gmra.mrb[0].mxu0 %v340
    %v511 = vpop.f32.mrb[0].mxu0
    %v512 = vadd.f32 %v379, %v511
    %v513 = vpop.f32.mrb[0].mxu0
    %v514 = vpop.f32.mrb[0].mxu0
    %v515 = vadd.f32 %v379, %v514
    %v516 = vpop.f32.mrb[0].mxu0
    %517 = vdwg.mxu0
    %s518 = sld [smem:[#allocation3 + $0x2]]
    %vm519 = vcmp.gt.f32.partialorder %v512, 0.0
    %vm520 = vcmp.gt.f32.partialorder %v515, 0.0
    %v521 = vstv %s518
    %v522 = vmul.f32 %v521, %v512
    %v523 = vmul.f32 %v521, %v515
    %v524 = vsel %vm519, %v512, %v522
    %v525 = vsel %vm520, %v515, %v523
    %v526 = vpack.c.bf16 %v525, %v524
    %v527 = vld [vmem:[%s8] sm:$0xf]
    %v528 = vld [vmem:[%s8 + $0x4] sm:$0xf]
    %v529 = vld [vmem:[%s8 + $0x8] sm:$0xf]
    %v530 = vld [vmem:[%s8 + $0xc] sm:$0xf]
    %v531 = vld [vmem:[%s8 + $0x10] sm:$0xf]
    %v532 = vld [vmem:[%s8 + $0x14] sm:$0xf]
    %v533 = vld [vmem:[%s8 + $0x18] sm:$0xf]
    %v534 = vld [vmem:[%s8 + $0x1c] sm:$0xf]
    %v535 = vld [vmem:[%s8 + $0x20] sm:$0xf]
    %v536 = vld [vmem:[%s8 + $0x24] sm:$0xf]
    %v537 = vld [vmem:[%s8 + $0x28] sm:$0xf]
    %v538 = vld [vmem:[%s8 + $0x2c] sm:$0xf]
    %v539 = vld [vmem:[%s8 + $0x30] sm:$0xf]
    %v540 = vld [vmem:[%s8 + $0x34] sm:$0xf]
    %v541 = vld [vmem:[%s8 + $0x38] sm:$0xf]
    %v542 = vld [vmem:[%s8 + $0x3c] sm:$0xf]
    %v543 = vld [vmem:[%s9] sm:$0x1]
    %v545 = vlaneseq
    %v546 = vshrl.u32 %v545, 7
    %v547 = vsub.s32 0, %v546
    %v548 = vrot.slane %v543, %v547
    %v566 = vunpack.c.l.b16 %v527
    %v567 = vunpack.c.l.b16 %v528
    %v568 = vunpack.c.l.b16 %v529
    %v569 = vunpack.c.l.b16 %v530
    %v570 = vunpack.c.l.b16 %v531
    %v571 = vunpack.c.l.b16 %v532
    %v572 = vunpack.c.l.b16 %v533
    %v573 = vunpack.c.l.b16 %v534
    %v574 = vunpack.c.l.b16 %v535
    %v575 = vunpack.c.l.b16 %v536
    %v576 = vunpack.c.l.b16 %v537
    %v577 = vunpack.c.l.b16 %v538
    %v578 = vunpack.c.l.b16 %v539
    %v579 = vunpack.c.l.b16 %v540
    %v580 = vunpack.c.l.b16 %v541
    %v581 = vunpack.c.l.b16 %v542
    %v582 = vpack.c.b16 %v567, %v566
    %v583 = vpack.c.b16 %v569, %v568
    %v584 = vpack.c.b16 %v571, %v570
    %v585 = vpack.c.b16 %v573, %v572
    %v586 = vpack.c.b16 %v575, %v574
    %v587 = vpack.c.b16 %v577, %v576
    %v588 = vpack.c.b16 %v579, %v578
    %v589 = vpack.c.b16 %v581, %v580
    %598 = vmatprep.subr.bf16.mxu0 0
    %599 = vmatpush1.bf16.msra.mxu0 %v582
    %600 = vmatprep.subr.bf16.mxu0 0
    %601 = vmatpush1.bf16.msra.mxu0 %v583
    %602 = vmatprep.subr.bf16.mxu0 0
    %603 = vmatpush1.bf16.msra.mxu0 %v584
    %604 = vmatprep.subr.bf16.mxu0 0
    %605 = vmatpush1.bf16.msra.mxu0 %v585
    %606 = vmatprep.subr.bf16.mxu0 0
    %607 = vmatpush1.bf16.msra.mxu0 %v586
    %608 = vmatprep.subr.bf16.mxu0 0
    %609 = vmatpush1.bf16.msra.mxu0 %v587
    %610 = vmatprep.subr.bf16.mxu0 0
    %611 = vmatpush1.bf16.msra.mxu0 %v588
    %612 = vmatprep.subr.bf16.mxu0 0
    %613 = vmatpush1.bf16.msra.mxu0 %v589
    %614 = vmatprep.subr.bf16.mxu0 0
    %615 = vmatpush1.bf16.msra.mxu0 0
    %616 = vmatprep.subr.bf16.mxu0 0
    %617 = vmatpush1.bf16.msra.mxu0 0
    %618 = vmatprep.subr.bf16.mxu0 0
    %619 = vmatpush1.bf16.msra.mxu0 0
    %620 = vmatprep.subr.bf16.mxu0 0
    %621 = vmatpush1.bf16.msra.mxu0 0
    %622 = vmatprep.subr.bf16.mxu0 0
    %623 = vmatpush1.bf16.msra.mxu0 0
    %624 = vmatprep.subr.bf16.mxu0 0
    %625 = vmatpush1.bf16.msra.mxu0 0
    %626 = vmatprep.subr.bf16.mxu0 0
    %627 = vmatpush1.bf16.msra.mxu0 0
    %628 = vmatprep.subr.bf16.mxu0 0
    %629 = vmatpush1.bf16.msra.mxu0 0
    %630 = vmatprep.mubr.bf16.mxu0 0
    %631 = vmatmul.mubr.bf16.gmra.mrb[0].mxu0 %v526
    %v632 = vpop.f32.mrb[0].mxu0
    %v633 = vadd.f32 %v548, %v632
    %v634 = vpop.f32.mrb[0].mxu0
    %v635 = vpop.f32.mrb[0].mxu0
    %v636 = vadd.f32 %v548, %v635
    %v637 = vpop.f32.mrb[0].mxu0
    %638 = vdwg.mxu0
    %vm639 = vcmask 15360
    %640 = vst.msk [vmem:[%s10] sm:$0xff] %vm639, %v633
    %641 = vst.msk [vmem:[%s10 + $0x8] sm:$0xff] %vm639, %v636
    // Predicated region
    $region46: #{tpu_custom_call.1} parent=1 // pred_check
      _
    $region47: #{tpu_custom_call.1} parent=1 // pred_check_branch
      %643 = sbr.rel (0) target = $region49
    $region48: #{tpu_custom_call.1} parent=1 // pred_region
      _
    $region49: #{tpu_custom_call.1} parent=1 // pred_fallthru
      _
    // Predicated region
    $region50: #{tpu_custom_call.1} parent=1 // pred_check
      _
    $region51: #{tpu_custom_call.1} parent=1 // pred_check_branch
      %645 = sbr.rel (0) target = $region53
    $region52: #{tpu_custom_call.1} parent=1 // pred_region
      _
    $region53: #{tpu_custom_call.1} parent=1 // pred_fallthru
      _
    %646 = vsyncpa [#allocation5], 1
    %647 = vsyncpa [#allocation7], 1

</llo_original>
